<compile_context>
chip_gen: v6e
topology: v6e:2x2x1
jax: 0.10.0
libtpu: 0.0.40
codegen_flags: <defaults>
</compile_context>

<pallas_src>
import functools

import jax
import jax.numpy as jnp
from jax.experimental import pallas as pl
from jax.experimental.pallas import tpu as pltpu

# ----------------------------- configuration --------------------------------
NQ = 2            # generalized coordinates (hard-coded as x[:, :2] in the spec)
NX = 2 * NQ       # state = [q, q_dot]
NH = 32           # hidden width
NU = NQ           # input dim (see bmm interpretation above)
NY = NQ           # output y = q
BATCH = 8

_W2_ROW = ((NX + 1 + 7) // 8) * 8                    # W2 block starts sublane-aligned (=8)
_W_COLS = 3 * NH                                     # fused slab width (=96)
_W_ROWS = ((_W2_ROW + 3 * NH + 1 + 7) // 8) * 8      # fused slab rows, sublane-aligned (=112)


# ------------------------------- kernel -------------------------------------
def _pinn_kernel(nq, nx, nh, u_ref, x_ref, w_ref, out_ref):
    f32 = jnp.float32
    x = x_ref[...]                      # (bb, nx)
    u = u_ref[...]                      # (bb, nq)
    q = x[:, 0:nq]
    q_dot = x[:, nq:nx]

    # ---- fused first layer: x @ [c_in | g_in(pad) | m_in(pad)] + fused bias
    w1 = w_ref[0:nx, 0:3 * nh]                        # (nx, 3*nh)
    b1 = w_ref[nx:nx + 1, 0:3 * nh]                   # (1, 3*nh)
    h = jnp.tanh(jnp.dot(x, w1, preferred_element_type=f32) + b1)   # (bb, 3*nh)

    # ---- fused second layer: [cx+gx | M_flat(column-major)] + fused bias
    r0 = ((nx + 1 + 7) // 8) * 8                      # W2 block row offset (tile-aligned)
    n2 = nq + nq * nq
    w2 = w_ref[r0:r0 + 3 * nh, 0:n2]                  # (3*nh, nq + nq*nq)
    b2 = w_ref[r0 + 3 * nh:r0 + 3 * nh + 1, 0:n2]     # (1,  nq + nq*nq)
    o2 = jnp.dot(h, w2, preferred_element_type=f32) + b2             # (bb, nq + nq*nq)

    # ---- v = u - (cx + gx)   (c_out/g_out packed into the same columns)
    v = u - o2[:, 0:nq]                               # (bb, nq)

    # ---- dqq[b, i] = sum_j M[b, i, j] * v[b, j]
    # M is packed column-major: columns nq + j*nq : nq + (j+1)*nq hold M[:, :, j].
    # Pure VPU: contiguous lane slices + broadcast multiplies + add (no MXU).
    dqq = o2[:, nq:2 * nq] * v[:, 0:1]
    for j in range(1, nq):                            # nq is tiny & static -> unrolled
        dqq = dqq + o2[:, nq + j * nq:nq + (j + 1) * nq] * v[:, j:j + 1]

    # ---- direct sub-stores of the lane-packed output [q_dot | dqq | q]
    out_ref[:, 0:nq] = q_dot
    out_ref[:, nq:2 * nq] = dqq
    out_ref[:, 2 * nq:3 * nq] = q


# ------------------------------ wrapper --------------------------------------
def pinn_forward(u, x, w_slab, *, block_b=256):
    """u: (B, nq), x: (B, nx) = [q, q_dot].  Returns (dx, y)."""
    B = x.shape[0]
    bb = min(block_b, max(8, ((B + 7) // 8) * 8))     # batch tile, sublane-aligned
    Bp = ((B + bb - 1) // bb) * bb
    if Bp != B:                                       # zero-pad ragged batch tail
        u = jnp.pad(u, ((0, Bp - B), (0, 0)))
        x = jnp.pad(x, ((0, Bp - B), (0, 0)))

    kernel = functools.partial(_pinn_kernel, NQ, NX, NH)
    out = pl.pallas_call(
        kernel,
        out_shape=jax.ShapeDtypeStruct((Bp, NX + NQ), jnp.float32),
        grid=(Bp // bb,),
        in_specs=[
            pl.BlockSpec((bb, NQ), lambda i: (i, 0)),            # u
            pl.BlockSpec((bb, NX), lambda i: (i, 0)),            # x
            pl.BlockSpec((_W_ROWS, _W_COLS), lambda i: (0, 0)),  # fused weights, resident
        ],
        out_specs=pl.BlockSpec((bb, NX + NQ), lambda i: (i, 0)),
        compiler_params=pltpu.CompilerParams(
            dimension_semantics=("parallel",)),       # megacore-shardable on v7x
    )(u, x, w_slab)
    out = out[:B]
    return out[:, :NX], out[:, NX:NX + NQ]


# --------------------------- parameter init ----------------------------------
def init_params(key):
    nq, nx, nh = NQ, NX, NH
    ks = jax.random.split(key, 8)

    def w(k, shape, scale=0.4):
        return scale * jax.random.normal(k, shape, jnp.float32)

    return {
        # c net: nn.Linear(nx, nh, bias=False), nn.Linear(nh, nq, bias=False)
        'c_in_w': w(ks[0], (nx, nh)),
        'c_out_w': w(ks[1], (nh, nq)),
        # g net: nn.Linear(nq, nh, bias=False), nn.Linear(nh, nq, bias=False)
        'g_in_w': w(ks[2], (nq, nh)),
        'g_out_w': w(ks[3], (nh, nq)),
        # assumed InertiaMatrix net (with biases)
        'm_in_w': w(ks[4], (nq, nh)),
        'm_in_b': w(ks[5], (1, nh)),
        'm_out_w': w(ks[6], (nh, nq * nq)),
        'm_out_b': w(ks[7], (1, nq * nq)),
    }


def pack_params(p):
    """Host-side one-time packing into ONE sublane-aligned fused weight slab."""
    nq, nx, nh = NQ, NX, NH
    f32 = jnp.float32

    # --- W1 block: x @ [c_in | g_in(pad) | m_in(pad)], bias folded as last row
    zpad = jnp.zeros((nx - nq, nh), f32)              # zero rows for q_dot part
    W1 = jnp.concatenate([
        p['c_in_w'],                                  # acts on full x
        jnp.concatenate([p['g_in_w'], zpad], axis=0), # acts on q only
        jnp.concatenate([p['m_in_w'], zpad], axis=0), # acts on q only
    ], axis=1)                                        # (nx, 3*nh)
    b1 = jnp.concatenate([jnp.zeros((1, 2 * nh), f32), p['m_in_b']], axis=1)
    blk1 = jnp.concatenate([W1, b1], axis=0)          # (nx+1, 3*nh)

    # --- W2 block: columns 0..nq-1 receive BOTH c_out and g_out (summed use),
    #     columns nq.. hold m_out in COLUMN-MAJOR flat order (col nq + j*nq + i = M[i,j]).
    n2 = nq + nq * nq
    W2 = jnp.zeros((3 * nh, n2), f32)
    W2 = W2.at[0:nh, 0:nq].set(p['c_out_w'])
    W2 = W2.at[nh:2 * nh, 0:nq].set(p['g_out_w'])
    m_out_cm = p['m_out_w'].reshape(nh, nq, nq).transpose(0, 2, 1).reshape(nh, nq * nq)
    W2 = W2.at[2 * nh:3 * nh, nq:].set(m_out_cm)
    m_out_b_cm = p['m_out_b'].reshape(1, nq, nq).transpose(0, 2, 1).reshape(1, nq * nq)
    b2 = jnp.concatenate([jnp.zeros((1, nq), f32), m_out_b_cm], axis=1)
    blk2 = jnp.concatenate([W2, b2], axis=0)          # (3*nh+1, nq+nq*nq)

    # --- one tile-aligned slab: blk1 at rows 0..nx, blk2 starting at row 8
    slab = jnp.zeros((_W_ROWS, _W_COLS), f32)
    slab = slab.at[0:nx + 1, 0:3 * nh].set(blk1)
    slab = slab.at[_W2_ROW:_W2_ROW + 3 * nh + 1, 0:n2].set(blk2)
    return slab


# ---------------------------- pure-JAX reference ------------------------------
def pinn_reference(u, x, p):
    q = x[:, :NQ]
    q_dot = x[:, NQ:]
    cx = jnp.tanh(x @ p['c_in_w']) @ p['c_out_w']
    gx = jnp.tanh(q @ p['g_in_w']) @ p['g_out_w']
    m = (jnp.tanh(q @ p['m_in_w'] + p['m_in_b']) @ p['m_out_w']
         + p['m_out_b']).reshape(-1, NQ, NQ)
    dqq = jnp.einsum('bij,bj->bi', m, -cx - gx + u)
    dx = jnp.concatenate([q_dot, dqq], axis=1)
    y = q
    return dx, y


# --------------------------------- main ---------------------------------------
if __name__ == "__main__":
    key = jax.random.PRNGKey(0)
    kp, ku, kx = jax.random.split(key, 3)
    params = init_params(kp)
    w_slab = pack_params(params)

    u = jax.random.normal(ku, (BATCH, NU), jnp.float32)
    x = jax.random.normal(kx, (BATCH, NX), jnp.float32)

    dx, y = pinn_forward(u, x, w_slab)
    jax.block_until_ready((dx, y))

    dx_ref, y_ref = pinn_reference(u, x, params)
    assert dx.shape == (BATCH, NX) and y.shape == (BATCH, NY)
    assert jnp.allclose(dx, dx_ref, atol=1e-4, rtol=1e-4), \
        float(jnp.max(jnp.abs(dx - dx_ref)))
    assert jnp.allclose(y, y_ref, atol=1e-4, rtol=1e-4)

    print("KERNEL_OK")
</pallas_src>

<mosaic_0001>
module attributes {stable_mosaic.version = 11 : i64} {
  func.func @_pinn_kernel(%arg0: i32, %arg1: memref<8x2xf32, #tpu.memory_space<vmem>>, %arg2: memref<8x4xf32, #tpu.memory_space<vmem>>, %arg3: memref<112x96xf32, #tpu.memory_space<vmem>>, %arg4: memref<8x6xf32, #tpu.memory_space<vmem>>) attributes {dimension_semantics = [#tpu.dimension_semantics<parallel>], iteration_bounds = array<i64: 1>, scalar_prefetch = 0 : i64, scratch_operands = 0 : i64, tpu.core_type = #tpu.core_type<tc>, window_params = [{transform_indices = @transform_0, window_bounds = array<i64: 8, 2>}, {transform_indices = @transform_1, window_bounds = array<i64: 8, 4>}, {pipeline_mode = #tpu.pipeline_mode<synchronous>, transform_indices = @transform_2, window_bounds = array<i64: 112, 96>}, {transform_indices = @transform_3, window_bounds = array<i64: 8, 6>}]} {
    %c0 = arith.constant 0 : index
    %c0_0 = arith.constant 0 : index
    %0 = vector.load %arg2[%c0, %c0_0] : memref<8x4xf32, #tpu.memory_space<vmem>>, vector<8x4xf32>
    %c0_1 = arith.constant 0 : index
    %c0_2 = arith.constant 0 : index
    %1 = vector.load %arg1[%c0_1, %c0_2] : memref<8x2xf32, #tpu.memory_space<vmem>>, vector<8x2xf32>
    %2 = vector.extract_strided_slice %0 {offsets = [0, 0], sizes = [8, 2], strides = [1, 1]} : vector<8x4xf32> to vector<8x2xf32>
    %3 = vector.extract_strided_slice %0 {offsets = [0, 2], sizes = [8, 2], strides = [1, 1]} : vector<8x4xf32> to vector<8x2xf32>
    %c0_3 = arith.constant 0 : index
    %c0_4 = arith.constant 0 : index
    %4 = vector.load %arg3[%c0_3, %c0_4] : memref<112x96xf32, #tpu.memory_space<vmem>>, vector<4x96xf32>
    %c4 = arith.constant 4 : index
    %c0_5 = arith.constant 0 : index
    %5 = vector.load %arg3[%c4, %c0_5] : memref<112x96xf32, #tpu.memory_space<vmem>>, vector<1x96xf32>
    %cst = arith.constant dense<0.000000e+00> : vector<8x96xf32>
    %6 = tpu.matmul %0, %4, %cst {dimension_numbers = #tpu.dot_dimension_numbers<[1], [0], [0], [1], [0, 0, 1, 1], [], []>} : vector<8x4xf32>, vector<4x96xf32>, vector<8x96xf32> -> vector<8x96xf32>
    %7 = vector.broadcast %5 : vector<1x96xf32> to vector<8x96xf32>
    %8 = arith.addf %6, %7 : vector<8x96xf32>
    %9 = math.tanh %8 : vector<8x96xf32>
    %c8 = arith.constant 8 : index
    %c0_6 = arith.constant 0 : index
    %10 = vector.load %arg3[%c8, %c0_6] : memref<112x96xf32, #tpu.memory_space<vmem>>, vector<96x6xf32>
    %c104 = arith.constant 104 : index
    %c0_7 = arith.constant 0 : index
    %11 = vector.load %arg3[%c104, %c0_7] : memref<112x96xf32, #tpu.memory_space<vmem>>, vector<1x6xf32>
    %cst_8 = arith.constant dense<0.000000e+00> : vector<8x6xf32>
    %12 = tpu.matmul %9, %10, %cst_8 {dimension_numbers = #tpu.dot_dimension_numbers<[1], [0], [0], [1], [0, 0, 1, 1], [], []>} : vector<8x96xf32>, vector<96x6xf32>, vector<8x6xf32> -> vector<8x6xf32>
    %13 = vector.broadcast %11 : vector<1x6xf32> to vector<8x6xf32>
    %14 = arith.addf %12, %13 : vector<8x6xf32>
    %15 = vector.extract_strided_slice %14 {offsets = [0, 0], sizes = [8, 2], strides = [1, 1]} : vector<8x6xf32> to vector<8x2xf32>
    %16 = arith.subf %1, %15 : vector<8x2xf32>
    %17 = vector.extract_strided_slice %14 {offsets = [0, 2], sizes = [8, 2], strides = [1, 1]} : vector<8x6xf32> to vector<8x2xf32>
    %18 = vector.extract_strided_slice %16 {offsets = [0, 0], sizes = [8, 1], strides = [1, 1]} : vector<8x2xf32> to vector<8x1xf32>
    %19 = vector.broadcast %18 : vector<8x1xf32> to vector<8x2xf32>
    %20 = arith.mulf %17, %19 : vector<8x2xf32>
    %21 = vector.extract_strided_slice %14 {offsets = [0, 4], sizes = [8, 2], strides = [1, 1]} : vector<8x6xf32> to vector<8x2xf32>
    %22 = vector.extract_strided_slice %16 {offsets = [0, 1], sizes = [8, 1], strides = [1, 1]} : vector<8x2xf32> to vector<8x1xf32>
    %23 = vector.broadcast %22 : vector<8x1xf32> to vector<8x2xf32>
    %24 = arith.mulf %21, %23 : vector<8x2xf32>
    %25 = arith.addf %20, %24 : vector<8x2xf32>
    %c0_9 = arith.constant 0 : index
    %c0_10 = arith.constant 0 : index
    %26 = vector.load %arg4[%c0_9, %c0_10] : memref<8x6xf32, #tpu.memory_space<vmem>>, vector<8x2xf32>
    tpu.vector_store %arg4[%c0_9, %c0_10], %3 {strides = array<i32>} : memref<8x6xf32, #tpu.memory_space<vmem>>, vector<8x2xf32>,
    %c0_11 = arith.constant 0 : index
    %c2 = arith.constant 2 : index
    %27 = vector.load %arg4[%c0_11, %c2] : memref<8x6xf32, #tpu.memory_space<vmem>>, vector<8x2xf32>
    tpu.vector_store %arg4[%c0_11, %c2], %25 {strides = array<i32>} : memref<8x6xf32, #tpu.memory_space<vmem>>, vector<8x2xf32>,
    %c0_12 = arith.constant 0 : index
    %c4_13 = arith.constant 4 : index
    %28 = vector.load %arg4[%c0_12, %c4_13] : memref<8x6xf32, #tpu.memory_space<vmem>>, vector<8x2xf32>
    tpu.vector_store %arg4[%c0_12, %c4_13], %2 {strides = array<i32>} : memref<8x6xf32, #tpu.memory_space<vmem>>, vector<8x2xf32>,
    return
  }
  func.func @transform_0(%arg0: i32) -> (i32, i32) {
    %c0_i32 = arith.constant 0 : i32
    %c0_i32_0 = arith.constant 0 : i32
    return %arg0, %c0_i32 : i32, i32
  }
  func.func @transform_1(%arg0: i32) -> (i32, i32) {
    %c0_i32 = arith.constant 0 : i32
    %c0_i32_0 = arith.constant 0 : i32
    return %arg0, %c0_i32 : i32, i32
  }
  func.func @transform_2(%arg0: i32) -> (i32, i32) {
    %c0_i32 = arith.constant 0 : i32
    %c0_i32_0 = arith.constant 0 : i32
    %c0_i32_1 = arith.constant 0 : i32
    return %c0_i32, %c0_i32_0 : i32, i32
  }
  func.func @transform_3(%arg0: i32) -> (i32, i32) {
    %c0_i32 = arith.constant 0 : i32
    %c0_i32_0 = arith.constant 0 : i32
    return %arg0, %c0_i32 : i32, i32
  }
}

</mosaic_0001>

<llo_original>
// kernel: tpu_custom_call.1
$region0: #{tpu_custom_call.1}
  #allocation0 [shape = 'u32[]', space=smem, size = 0x4, offset = 0x4, fixed_abs, tag = 'smem constant byte address 0x4 - core index']
  #allocation1 [shape = 'u32[144,128]{1,0:T(1,128)}', space=vmem, size = 0x12000, scoped, tag = 'internal scratch']
  %s0 = inlined_call_operand.vmem [shape: f32[8,2], index: 0, kind: input, shape index: {}]
  %s1 = inlined_call_operand.vmem [shape: f32[8,4], index: 1, kind: input, shape index: {}]
  %s2 = inlined_call_operand.vmem [shape: f32[112,96], index: 2, kind: input, shape index: {}]
  %s3 = inlined_call_operand.hbm [shape: f32[8,6], index: 3, kind: output, shape index: {}]
  %s4 = sld [smem:[#allocation0]]
  $region22: #{tpu_custom_call.1} parent=0
    _
  %s6 = ssub.s32 1, %s4
  %s7 = scalar_select 0, %s6, %s4
  $region1: #{tpu_custom_call.1} parent=0
    #allocation2 [shape = 'u8[4096]{0}', space=vmem, size = 0x1000, scoped, tag = 'output window, operand 0, single buffered']
    #allocation3 [shape = 's32[1]{0}', space=sflag, size = 0x4, scoped, tag = 'scoped memory for tpu_custom_call.1']
    %8 = vsyncpa [#allocation3], 0
    // Predicated region
    $region2: #{tpu_custom_call.1} parent=1 // pred_check
      _
    $region3: #{tpu_custom_call.1} parent=1 // pred_check_branch
      %10 = sbr.rel (0) target = $region5
    $region4: #{tpu_custom_call.1} parent=1 // pred_region
      _
    $region5: #{tpu_custom_call.1} parent=1 // pred_fallthru
      _
    // Predicated region
    $region6: #{tpu_custom_call.1} parent=1 // pred_check
      _
    $region7: #{tpu_custom_call.1} parent=1 // pred_check_branch
      %12 = sbr.rel (0) target = $region9
    $region8: #{tpu_custom_call.1} parent=1 // pred_region
      _
    $region9: #{tpu_custom_call.1} parent=1 // pred_fallthru
      _
    // Predicated region
    $region10: #{tpu_custom_call.1} parent=1 // pred_check
      _
    $region11: #{tpu_custom_call.1} parent=1 // pred_check_branch
      %14 = sbr.rel (0) target = $region13
    $region12: #{tpu_custom_call.1} parent=1 // pred_region
      _
    $region13: #{tpu_custom_call.1} parent=1 // pred_fallthru
      _
    %v15 = vld [vmem:[%s1] sm:$0xff]
    %v16 = vld [vmem:[%s0] sm:$0xff]
    %v17 = vld [vmem:[%s2] sm:$0xf]
    %v18 = vld [vmem:[%s2 + $0x4] sm:$0x1]
    %v19 = vlaneseq
    %v20 = vshrl.u32 %v19, 7
    %v21 = vsub.s32 0, %v20
    %v22 = vrot.slane %v18, %v21
    %vm23 = vcmask 31744
    %v25 = vsel %vm23, %v15, 0
    %vm27 = vcmask 1043456
    %v29 = vsel %vm27, %v17, 0
    %31 = vmatprep.subr.mxu0 0.0
    %32 = vmatpush1.msra.mxu0 0.0
    %33 = vmatprep.subr.mxu0 0.0
    %34 = vmatpush1.msra.mxu0 0.0
    %35 = vmatprep.subr.mxu0 0.0
    %36 = vmatpush1.msra.mxu0 0.0
    %37 = vmatprep.subr.mxu0 0.0
    %38 = vmatpush1.msra.mxu0 0.0
    %39 = vmatprep.subr.mxu0 0.0
    %40 = vmatpush1.msra.mxu0 0.0
    %41 = vmatprep.subr.mxu0 0.0
    %42 = vmatpush1.msra.mxu0 0.0
    %43 = vmatprep.subr.mxu0 0.0
    %44 = vmatpush1.msra.mxu0 0.0
    %45 = vmatprep.subr.mxu0 0.0
    %46 = vmatpush1.msra.mxu0 0.0
    %47 = vmatprep.subr.mxu0 0.0
    %48 = vmatpush1.msra.mxu0 0.0
    %49 = vmatprep.subr.mxu0 0.0
    %50 = vmatpush1.msra.mxu0 0.0
    %51 = vmatprep.subr.mxu0 0.0
    %52 = vmatpush1.msra.mxu0 0.0
    %53 = vmatprep.subr.mxu0 0.0
    %54 = vmatpush1.msra.mxu0 0.0
    %55 = vmatprep.subr.mxu0 0.0
    %56 = vmatpush1.msra.mxu0 0.0
    %57 = vmatprep.subr.mxu0 0.0
    %58 = vmatpush1.msra.mxu0 0.0
    %59 = vmatprep.subr.mxu0 0.0
    %60 = vmatpush1.msra.mxu0 0.0
    %61 = vmatprep.subr.mxu0 0.0
    %62 = vmatpush1.msra.mxu0 %v29
    %63 = vmatprep.subr.mxu0 0.0
    %64 = vmatpush2.msra.mxu0 0.0
    %65 = vmatprep.subr.mxu0 0.0
    %66 = vmatpush2.msra.mxu0 0.0
    %67 = vmatprep.subr.mxu0 0.0
    %68 = vmatpush2.msra.mxu0 0.0
    %69 = vmatprep.subr.mxu0 0.0
    %70 = vmatpush2.msra.mxu0 0.0
    %71 = vmatprep.subr.mxu0 0.0
    %72 = vmatpush2.msra.mxu0 0.0
    %73 = vmatprep.subr.mxu0 0.0
    %74 = vmatpush2.msra.mxu0 0.0
    %75 = vmatprep.subr.mxu0 0.0
    %76 = vmatpush2.msra.mxu0 0.0
    %77 = vmatprep.subr.mxu0 0.0
    %78 = vmatpush2.msra.mxu0 0.0
    %79 = vmatprep.subr.mxu0 0.0
    %80 = vmatpush2.msra.mxu0 0.0
    %81 = vmatprep.subr.mxu0 0.0
    %82 = vmatpush2.msra.mxu0 0.0
    %83 = vmatprep.subr.mxu0 0.0
    %84 = vmatpush2.msra.mxu0 0.0
    %85 = vmatprep.subr.mxu0 0.0
    %86 = vmatpush2.msra.mxu0 0.0
    %87 = vmatprep.subr.mxu0 0.0
    %88 = vmatpush2.msra.mxu0 0.0
    %89 = vmatprep.subr.mxu0 0.0
    %90 = vmatpush2.msra.mxu0 0.0
    %91 = vmatprep.subr.mxu0 0.0
    %92 = vmatpush2.msra.mxu0 0.0
    %93 = vmatprep.subr.mxu0 0.0
    %94 = vmatpush2.msra.mxu0 0.0
    %95 = vmatprep.mubr.f32.mxu0 0.0
    %96 = vmatmul.mubr.f32.gmra.mxu0 %v25
    %v97 = vpop.f32.mrf.mxu0
    %v98 = vadd.f32 %v22, %v97
    %v99 = vpop.f32.mrf.mxu0
    %100 = vdwg.mxu0
    %v101 = vtanh.pop %v98
    %v102 = vld [vmem:[%s2 + $0x8] sm:$0xff]
    %v103 = vld [vmem:[%s2 + $0x10] sm:$0xff]
    %v104 = vld [vmem:[%s2 + $0x18] sm:$0xff]
    %v105 = vld [vmem:[%s2 + $0x20] sm:$0xff]
    %v106 = vld [vmem:[%s2 + $0x28] sm:$0xff]
    %v107 = vld [vmem:[%s2 + $0x30] sm:$0xff]
    %v108 = vld [vmem:[%s2 + $0x38] sm:$0xff]
    %v109 = vld [vmem:[%s2 + $0x40] sm:$0xff]
    %v110 = vld [vmem:[%s2 + $0x48] sm:$0xff]
    %v111 = vld [vmem:[%s2 + $0x50] sm:$0xff]
    %v112 = vld [vmem:[%s2 + $0x58] sm:$0xff]
    %v113 = vld [vmem:[%s2 + $0x60] sm:$0xff]
    %v114 = vld [vmem:[%s2 + $0x68] sm:$0x1]
    %v115 = vlaneseq
    %v116 = vshrl.u32 %v115, 7
    %v117 = vsub.s32 0, %v116
    %v118 = vrot.slane %v114, %v117
    %vm119 = vcmask 785408
    %v121 = vsel %vm119, %v101, 0
    %123 = vmatprep.subr.mxu0 0.0
    %124 = vmatpush1.msra.mxu0 0.0
    %125 = vmatprep.subr.mxu0 0.0
    %126 = vmatpush1.msra.mxu0 0.0
    %127 = vmatprep.subr.mxu0 0.0
    %128 = vmatpush1.msra.mxu0 0.0
    %129 = vmatprep.subr.mxu0 0.0
    %130 = vmatpush1.msra.mxu0 0.0
    %131 = vmatprep.subr.mxu0 0.0
    %132 = vmatpush1.msra.mxu0 %v113
    %133 = vmatprep.subr.mxu0 0.0
    %134 = vmatpush1.msra.mxu0 %v112
    %135 = vmatprep.subr.mxu0 0.0
    %136 = vmatpush1.msra.mxu0 %v111
    %137 = vmatprep.subr.mxu0 0.0
    %138 = vmatpush1.msra.mxu0 %v110
    %139 = vmatprep.subr.mxu0 0.0
    %140 = vmatpush1.msra.mxu0 %v109
    %141 = vmatprep.subr.mxu0 0.0
    %142 = vmatpush1.msra.mxu0 %v108
    %143 = vmatprep.subr.mxu0 0.0
    %144 = vmatpush1.msra.mxu0 %v107
    %145 = vmatprep.subr.mxu0 0.0
    %146 = vmatpush1.msra.mxu0 %v106
    %147 = vmatprep.subr.mxu0 0.0
    %148 = vmatpush1.msra.mxu0 %v105
    %149 = vmatprep.subr.mxu0 0.0
    %150 = vmatpush1.msra.mxu0 %v104
    %151 = vmatprep.subr.mxu0 0.0
    %152 = vmatpush1.msra.mxu0 %v103
    %153 = vmatprep.subr.mxu0 0.0
    %154 = vmatpush1.msra.mxu0 %v102
    %155 = vmatprep.subr.mxu0 0.0
    %156 = vmatpush2.msra.mxu0 0.0
    %157 = vmatprep.subr.mxu0 0.0
    %158 = vmatpush2.msra.mxu0 0.0
    %159 = vmatprep.subr.mxu0 0.0
    %160 = vmatpush2.msra.mxu0 0.0
    %161 = vmatprep.subr.mxu0 0.0
    %162 = vmatpush2.msra.mxu0 0.0
    %163 = vmatprep.subr.mxu0 0.0
    %164 = vmatpush2.msra.mxu0 0.0
    %165 = vmatprep.subr.mxu0 0.0
    %166 = vmatpush2.msra.mxu0 0.0
    %167 = vmatprep.subr.mxu0 0.0
    %168 = vmatpush2.msra.mxu0 0.0
    %169 = vmatprep.subr.mxu0 0.0
    %170 = vmatpush2.msra.mxu0 0.0
    %171 = vmatprep.subr.mxu0 0.0
    %172 = vmatpush2.msra.mxu0 0.0
    %173 = vmatprep.subr.mxu0 0.0
    %174 = vmatpush2.msra.mxu0 0.0
    %175 = vmatprep.subr.mxu0 0.0
    %176 = vmatpush2.msra.mxu0 0.0
    %177 = vmatprep.subr.mxu0 0.0
    %178 = vmatpush2.msra.mxu0 0.0
    %179 = vmatprep.subr.mxu0 0.0
    %180 = vmatpush2.msra.mxu0 0.0
    %181 = vmatprep.subr.mxu0 0.0
    %182 = vmatpush2.msra.mxu0 0.0
    %183 = vmatprep.subr.mxu0 0.0
    %184 = vmatpush2.msra.mxu0 0.0
    %185 = vmatprep.subr.mxu0 0.0
    %186 = vmatpush2.msra.mxu0 0.0
    %187 = vmatprep.mubr.f32.mxu0 0.0
    %188 = vmatmul.mubr.f32.gmra.mxu0 %v121
    %v189 = vpop.f32.mrf.mxu0
    %v190 = vadd.f32 %v118, %v189
    %v191 = vpop.f32.mrf.mxu0
    %192 = vdwg.mxu0
    %v193 = vsub.f32 %v16, %v190
    %195 = vset.pattern.permute.xlu0 0
    %196 = vperm.xlu0 %195, %v193
    %v197 = vpop.permute.xlu0 %196
    %v199 = vmul.f32 %v190, %v197
    %200 = vset.pattern.permute.xlu0 1
    %201 = vperm.xlu0 %200, %v193
    %v202 = vpop.permute.xlu0 %201
    %v204 = vmul.f32 %v190, %v202
    %206 = vrot.lane.b32.xlu0 %v204, 126
    %v207 = vpop.permute.xlu0 %206
    %v209 = vadd.f32 %v199, %v207
    %210 = vrot.lane.b32.xlu0 %v15, 126
    %v211 = vpop.permute.xlu0 %210
    %vm213 = vcmask 15360
    %214 = vst.msk [vmem:[#allocation2] sm:$0xff] %vm213, %v211
    %vm215 = vcmask 31760
    %216 = vst.msk [vmem:[#allocation2] sm:$0xff] %vm215, %v209
    %217 = vrot.lane.b32.xlu0 %v15, 4
    %v218 = vpop.permute.xlu0 %217
    %vm220 = vcmask 48160
    %221 = vst.msk [vmem:[#allocation2] sm:$0xff] %vm220, %v218
    // Predicated region
    $region14: #{tpu_custom_call.1} parent=1 // pred_check
      _
    $region15: #{tpu_custom_call.1} parent=1 // pred_check_branch
      %223 = sbr.rel (0) target = $region17
    $region16: #{tpu_custom_call.1} parent=1 // pred_region
      %s225 = ssub.s32 128, 128
      %226 = vsyncadd [#allocation3], %s225
      %s228 = sshll.u32 [#allocation2], 4
      %s229 = int_to_ptr.vmem [resolvable:$true] %s228
      %231 = dma.vmem_to_hbm [thread:$0]  %s229, 128, %s3, [#allocation3]
    $region17: #{tpu_custom_call.1} parent=1 // pred_fallthru
      _
    // Predicated region
    $region18: #{tpu_custom_call.1} parent=1 // pred_check
      _
    $region19: #{tpu_custom_call.1} parent=1 // pred_check_branch
      %233 = sbr.rel (0) target = $region21
    $region20: #{tpu_custom_call.1} parent=1 // pred_region
      %234 = dma.done [#allocation3], 128
    $region21: #{tpu_custom_call.1} parent=1 // pred_fallthru
      _
    %235 = vsyncpa [#allocation3], 1

</llo_original>
